<compile_context>
chip_gen: v7x
topology: tpu7x:2x2x1
jax: 0.10.0
libtpu: 0.0.40
codegen_flags: <defaults>
</compile_context>

<pallas_src>
import jax
import jax.numpy as jnp
from jax.experimental import pallas as pl
from jax.experimental.pallas import tpu as pltpu


def lr_kernel(idx_ref, w_ref, offsets_ref, bias_ref, out_ref):
    # idx_ref:     (F, TB)    int32, batch on lanes (raw per-field indices, offsets not applied)
    # w_ref:       (V_pad, 1) f32, vocab on sublanes (zero padded past V)
    # offsets_ref: (F,)       int32 in SMEM
    # bias_ref:    (1, 1)     f32   in SMEM
    # out_ref:     (1, TB)    f32, lane-dense batch output
    F = idx_ref.shape[0]
    V_pad = w_ref.shape[0]
    TB = out_ref.shape[1]

    # Hoisted constants (built once, reused per field; JAX does not CSE broadcasts).
    iota_v = jax.lax.broadcasted_iota(jnp.int32, (V_pad, 1), 0)   # vocab ids on sublanes
    w_b = jnp.broadcast_to(w_ref[...], (V_pad, TB))               # weights broadcast over lanes

    acc = jnp.zeros((1, TB), jnp.float32)
    for f in range(F):                                            # F tiny & static -> fully unrolled
        row = idx_ref[f:f + 1, :] + offsets_ref[f]                # (1, TB), fused offset add
        hit = row == iota_v                                       # (V_pad, TB) one-hot mask (VPU)
        acc = acc + jnp.sum(jnp.where(hit, w_b, 0.0),
                            axis=0, keepdims=True)                # sublane reduce (XLU) -> (1, TB)

    # NOTE: out-of-range indices silently contribute 0 (PyTorch nn.Embedding would fault).
    out_ref[...] = acc + bias_ref[0, 0]


def logistic_regression_forward(x_idx, weight, bias, field_dims, tb=128):
    """x_idx: (B, F) int raw per-field indices; weight: (V, 1) f32; bias: (1,) f32 -> (B, 1) f32."""
    # TODO(synk): for production-scale vocabularies (V >> 1e4) replace the one-hot compare with a
    # scalar-prefetch gather (PrefetchScalarGridSpec driving per-row DMA of embedding rows).
    B, F = x_idx.shape
    V = weight.shape[0]
    V_pad = pl.cdiv(V, 128) * 128
    B_pad = pl.cdiv(B, tb) * tb
    num_tiles = B_pad // tb

    offsets = jnp.concatenate(
        [jnp.zeros((1,), jnp.int32),
         jnp.cumsum(jnp.array(field_dims, jnp.int32))[:-1]]
    ).astype(jnp.int32)                                            # (F,)

    # Lane-dense layouts: batch on lanes, vocab on sublanes (both zero padded).
    idx_t = jnp.zeros((F, B_pad), jnp.int32).at[:, :B].set(x_idx.T.astype(jnp.int32))
    w_pad = jnp.zeros((V_pad, 1), jnp.float32).at[:V, :].set(weight.astype(jnp.float32))
    bias_2d = bias.reshape(1, 1).astype(jnp.float32)

    out_row = pl.pallas_call(
        lr_kernel,
        out_shape=jax.ShapeDtypeStruct((1, B_pad), jnp.float32),
        grid=(num_tiles,),
        in_specs=[
            pl.BlockSpec((F, tb), lambda i: (0, i)),               # index tile (double-buffered)
            pl.BlockSpec(memory_space=pltpu.MemorySpace.VMEM),     # weight column, VMEM-resident
            pl.BlockSpec(memory_space=pltpu.MemorySpace.SMEM),     # offsets
            pl.BlockSpec(memory_space=pltpu.MemorySpace.SMEM),     # bias
        ],
        out_specs=pl.BlockSpec((1, tb), lambda i: (0, i)),         # lane-dense output slab
        compiler_params=pltpu.CompilerParams(
            dimension_semantics=("parallel",),                     # megacore sharding on v7x
        ),
    )(idx_t, w_pad, offsets, bias_2d)

    return out_row.reshape(B_pad, 1)[:B]


if __name__ == "__main__":
    field_dims = (10, 20, 30)          # V = 60
    V = sum(field_dims)
    B, F = 8, len(field_dims)

    key = jax.random.PRNGKey(0)
    k_w, k_x = jax.random.split(key)

    # deterministic synthetic parameters (no checkpoint)
    weight = jax.random.normal(k_w, (V, 1), jnp.float32) * 0.01
    bias = jnp.zeros((1,), jnp.float32)

    # raw per-field indices in [0, field_dims[f])
    maxes = jnp.array(field_dims, jnp.int32)
    x_idx = (jax.random.randint(k_x, (B, F), 0, 1 << 30) % maxes[None, :]).astype(jnp.int32)

    out = logistic_regression_forward(x_idx, weight, bias, field_dims)
    out = jax.block_until_ready(out)

    # pure-JAX reference: embedding lookup + sum over fields + bias
    offsets = jnp.concatenate(
        [jnp.zeros((1,), jnp.int32), jnp.cumsum(jnp.array(field_dims, jnp.int32))[:-1]]
    )
    ref = jnp.sum(weight[x_idx + offsets[None, :], 0], axis=1, keepdims=True) + bias

    assert out.shape == (B, 1), out.shape
    assert jnp.allclose(out, ref, atol=1e-5), (out, ref)
    print("KERNEL_OK")
</pallas_src>

<mosaic_0001>
module attributes {stable_mosaic.version = 11 : i64} {
  func.func @lr_kernel(%arg0: i32, %arg1: memref<3x128xi32, #tpu.memory_space<vmem>>, %arg2: memref<128x1xf32, #tpu.memory_space<vmem>>, %arg3: memref<3xi32, #tpu.memory_space<smem>>, %arg4: memref<1x1xf32, #tpu.memory_space<smem>>, %arg5: memref<1x128xf32, #tpu.memory_space<vmem>>) attributes {dimension_semantics = [#tpu.dimension_semantics<parallel>], iteration_bounds = array<i64: 1>, scalar_prefetch = 0 : i64, scratch_operands = 0 : i64, tpu.core_type = #tpu.core_type<tc>, window_params = [{transform_indices = @transform_0, window_bounds = array<i64: 3, 128>}, {pipeline_mode = #tpu.pipeline_mode<synchronous>, transform_indices = @transform_1, window_bounds = array<i64: 128, 1>}, {transform_indices = @transform_2, window_bounds = array<i64: 3>}, {transform_indices = @transform_3, window_bounds = array<i64: 1, 1>}, {transform_indices = @transform_4, window_bounds = array<i64: 1, 128>}]} {
    %0 = tpu.iota {dimensions = array<i32: 0>} : vector<128x1xi32>
    %c0 = arith.constant 0 : index
    %c0_0 = arith.constant 0 : index
    %1 = vector.load %arg2[%c0, %c0_0] : memref<128x1xf32, #tpu.memory_space<vmem>>, vector<128x1xf32>
    %2 = vector.shape_cast %1 : vector<128x1xf32> to vector<128x1xf32>
    %3 = vector.broadcast %2 : vector<128x1xf32> to vector<128x128xf32>
    %cst = arith.constant 0.000000e+00 : f32
    %4 = vector.broadcast %cst : f32 to vector<1x128xf32>
    %c0_1 = arith.constant 0 : index
    %c0_2 = arith.constant 0 : index
    %5 = vector.load %arg1[%c0_1, %c0_2] : memref<3x128xi32, #tpu.memory_space<vmem>>, vector<1x128xi32>
    %c0_3 = arith.constant 0 : index
    %6 = memref.load %arg3[%c0_3] : memref<3xi32, #tpu.memory_space<smem>>
    %7 = vector.broadcast %6 : i32 to vector<1x128xi32>
    %8 = arith.addi %5, %7 : vector<1x128xi32>
    %9 = vector.broadcast %8 : vector<1x128xi32> to vector<128x128xi32>
    %10 = vector.broadcast %0 : vector<128x1xi32> to vector<128x128xi32>
    %11 = arith.cmpi eq, %9, %10 : vector<128x128xi32>
    %cst_4 = arith.constant 0.000000e+00 : f32
    %12 = vector.broadcast %cst_4 : f32 to vector<128x128xf32>
    %13 = arith.select %11, %3, %12 : vector<128x128xi1>, vector<128x128xf32>
    %cst_5 = arith.constant dense<0.000000e+00> : vector<128xf32>
    %14 = vector.multi_reduction <add>, %13, %cst_5 [0] : vector<128x128xf32> to vector<128xf32>
    %15 = vector.shape_cast %14 : vector<128xf32> to vector<1x128xf32>
    %16 = arith.addf %4, %15 : vector<1x128xf32>
    %c1 = arith.constant 1 : index
    %c0_6 = arith.constant 0 : index
    %17 = vector.load %arg1[%c1, %c0_6] : memref<3x128xi32, #tpu.memory_space<vmem>>, vector<1x128xi32>
    %c1_7 = arith.constant 1 : index
    %18 = memref.load %arg3[%c1_7] : memref<3xi32, #tpu.memory_space<smem>>
    %19 = vector.broadcast %18 : i32 to vector<1x128xi32>
    %20 = arith.addi %17, %19 : vector<1x128xi32>
    %21 = vector.broadcast %20 : vector<1x128xi32> to vector<128x128xi32>
    %22 = vector.broadcast %0 : vector<128x1xi32> to vector<128x128xi32>
    %23 = arith.cmpi eq, %21, %22 : vector<128x128xi32>
    %cst_8 = arith.constant 0.000000e+00 : f32
    %24 = vector.broadcast %cst_8 : f32 to vector<128x128xf32>
    %25 = arith.select %23, %3, %24 : vector<128x128xi1>, vector<128x128xf32>
    %cst_9 = arith.constant dense<0.000000e+00> : vector<128xf32>
    %26 = vector.multi_reduction <add>, %25, %cst_9 [0] : vector<128x128xf32> to vector<128xf32>
    %27 = vector.shape_cast %26 : vector<128xf32> to vector<1x128xf32>
    %28 = arith.addf %16, %27 : vector<1x128xf32>
    %c2 = arith.constant 2 : index
    %c0_10 = arith.constant 0 : index
    %29 = vector.load %arg1[%c2, %c0_10] : memref<3x128xi32, #tpu.memory_space<vmem>>, vector<1x128xi32>
    %c2_11 = arith.constant 2 : index
    %30 = memref.load %arg3[%c2_11] : memref<3xi32, #tpu.memory_space<smem>>
    %31 = vector.broadcast %30 : i32 to vector<1x128xi32>
    %32 = arith.addi %29, %31 : vector<1x128xi32>
    %33 = vector.broadcast %32 : vector<1x128xi32> to vector<128x128xi32>
    %34 = vector.broadcast %0 : vector<128x1xi32> to vector<128x128xi32>
    %35 = arith.cmpi eq, %33, %34 : vector<128x128xi32>
    %cst_12 = arith.constant 0.000000e+00 : f32
    %36 = vector.broadcast %cst_12 : f32 to vector<128x128xf32>
    %37 = arith.select %35, %3, %36 : vector<128x128xi1>, vector<128x128xf32>
    %cst_13 = arith.constant dense<0.000000e+00> : vector<128xf32>
    %38 = vector.multi_reduction <add>, %37, %cst_13 [0] : vector<128x128xf32> to vector<128xf32>
    %39 = vector.shape_cast %38 : vector<128xf32> to vector<1x128xf32>
    %40 = arith.addf %28, %39 : vector<1x128xf32>
    %c0_14 = arith.constant 0 : index
    %c0_15 = arith.constant 0 : index
    %41 = memref.load %arg4[%c0_14, %c0_15] : memref<1x1xf32, #tpu.memory_space<smem>>
    %42 = vector.broadcast %41 : f32 to vector<1x128xf32>
    %43 = arith.addf %40, %42 : vector<1x128xf32>
    %c0_16 = arith.constant 0 : index
    %c0_17 = arith.constant 0 : index
    %44 = vector.load %arg5[%c0_16, %c0_17] : memref<1x128xf32, #tpu.memory_space<vmem>>, vector<1x128xf32>
    tpu.vector_store %arg5[%c0_16, %c0_17], %43 {strides = array<i32>} : memref<1x128xf32, #tpu.memory_space<vmem>>, vector<1x128xf32>,
    return
  }
  func.func @transform_0(%arg0: i32) -> (i32, i32) {
    %c0_i32 = arith.constant 0 : i32
    %c0_i32_0 = arith.constant 0 : i32
    return %c0_i32, %arg0 : i32, i32
  }
  func.func @transform_1(%arg0: i32) -> (i32, i32) {
    %c0_i32 = arith.constant 0 : i32
    %c0_i32_0 = arith.constant 0 : i32
    %c0_i32_1 = arith.constant 0 : i32
    return %c0_i32, %c0_i32_0 : i32, i32
  }
  func.func @transform_2(%arg0: i32) -> i32 {
    %c0_i32 = arith.constant 0 : i32
    %c0_i32_0 = arith.constant 0 : i32
    return %c0_i32 : i32
  }
  func.func @transform_3(%arg0: i32) -> (i32, i32) {
    %c0_i32 = arith.constant 0 : i32
    %c0_i32_0 = arith.constant 0 : i32
    %c0_i32_1 = arith.constant 0 : i32
    return %c0_i32, %c0_i32_0 : i32, i32
  }
  func.func @transform_4(%arg0: i32) -> (i32, i32) {
    %c0_i32 = arith.constant 0 : i32
    %c0_i32_0 = arith.constant 0 : i32
    return %c0_i32, %arg0 : i32, i32
  }
}

</mosaic_0001>

<llo_original>
// kernel: tpu_custom_call.1
$region0: #{tpu_custom_call.1}
  #allocation0 [shape = 'u32[]', space=smem, size = 0x4, offset = 0x4, fixed_abs, tag = 'smem constant byte address 0x4 - core index']
  #allocation1 [shape = 'u32[144,128]{1,0:T(1,128)}', space=vmem, size = 0x12000, scoped, tag = 'internal scratch']
  #allocation2 [shape = 'f32[1,1]{1,0:T(1,128)S(6)}', space=smem, size = 0x200, scoped, tag = 'scoped memory for tpu_custom_call.1']
  %s0 = inlined_call_operand.vmem [shape: s32[3,128], index: 0, kind: input, shape index: {}]
  %s1 = inlined_call_operand.vmem [shape: f32[128,1], index: 1, kind: input, shape index: {}]
  %s2 = inlined_call_operand.vmem [shape: s32[3], index: 2, kind: input, shape index: {}]
  %s3 = inlined_call_operand.<no memory space> [shape: f32[1,1], index: 3, kind: input, shape index: {}]
  %s4 = inlined_call_operand.hbm [shape: f32[1,128], index: 4, kind: output, shape index: {}]
  %s5 = sld [smem:[#allocation0]]
  $region30: #{tpu_custom_call.1} parent=0
    _
  %s7 = ssub.s32 1, %s5
  %s8 = scalar_select 0, %s7, %s5
  %9 = sst [smem:[#allocation2]] %s3
  $region1: #{tpu_custom_call.1} parent=0
    #allocation3 [shape = 'u8[512]{0}', space=smem, size = 0x200, scoped, tag = 'input window, operand 2, single buffered']
    #allocation4 [shape = 's32[1]{0}', space=sflag, size = 0x4, scoped, tag = 'scoped memory for tpu_custom_call.1']
    #allocation5 [shape = 's32[1]{0}', space=sflag, size = 0x4, scoped, tag = 'scoped memory for tpu_custom_call.1']
    #allocation6 [shape = 'u8[512]{0}', space=vmem, size = 0x400, scoped, tag = 'output window, operand 0, single buffered']
    %10 = vsyncpa [#allocation5], 0
    %11 = vsyncpa [#allocation4], 0
    // Predicated region
    $region2: #{tpu_custom_call.1} parent=1 // pred_check
      _
    $region3: #{tpu_custom_call.1} parent=1 // pred_check_branch
      %13 = sbr.rel (0) target = $region5
    $region4: #{tpu_custom_call.1} parent=1 // pred_region
      _
    $region5: #{tpu_custom_call.1} parent=1 // pred_fallthru
      _
    // Predicated region
    $region6: #{tpu_custom_call.1} parent=1 // pred_check
      _
    $region7: #{tpu_custom_call.1} parent=1 // pred_check_branch
      %15 = sbr.rel (0) target = $region9
    $region8: #{tpu_custom_call.1} parent=1 // pred_region
      _
    $region9: #{tpu_custom_call.1} parent=1 // pred_fallthru
      _
    // Predicated region
    $region10: #{tpu_custom_call.1} parent=1 // pred_check
      _
    $region11: #{tpu_custom_call.1} parent=1 // pred_check_branch
      %17 = sbr.rel (0) target = $region13
    $region12: #{tpu_custom_call.1} parent=1 // pred_region
      %s19 = ssub.s32 16, 16
      %20 = vsyncadd [#allocation5], %s19
      %s22 = sshll.u32 %s2, 4
      %s23 = int_to_ptr.vmem [resolvable:$true] %s22
      %25 = dma.vmem_to_smem %s23, 16, [#allocation3], [#allocation5]
    $region13: #{tpu_custom_call.1} parent=1 // pred_fallthru
      _
    // Predicated region
    $region14: #{tpu_custom_call.1} parent=1 // pred_check
      _
    $region15: #{tpu_custom_call.1} parent=1 // pred_check_branch
      %27 = sbr.rel (0) target = $region17
    $region16: #{tpu_custom_call.1} parent=1 // pred_region
      _
    $region17: #{tpu_custom_call.1} parent=1 // pred_fallthru
      _
    // Predicated region
    $region18: #{tpu_custom_call.1} parent=1 // pred_check
      _
    $region19: #{tpu_custom_call.1} parent=1 // pred_check_branch
      %29 = sbr.rel (0) target = $region21
    $region20: #{tpu_custom_call.1} parent=1 // pred_region
      %30 = dma.done [#allocation5], 16
    $region21: #{tpu_custom_call.1} parent=1 // pred_fallthru
      _
    %31 = sfence
    %v32 = vlaneseq
    %v33 = vshrl.u32 %v32, 7
    %v34 = vadd.s32 %v33, 8
    %v35 = vadd.s32 %v33, 16
    %v36 = vadd.s32 %v33, 24
    %v37 = vadd.s32 %v33, 32
    %v38 = vadd.s32 %v33, 40
    %v39 = vadd.s32 %v33, 48
    %v40 = vadd.s32 %v33, 56
    %v41 = vadd.s32 %v33, 64
    %v42 = vadd.s32 %v33, 72
    %v43 = vadd.s32 %v33, 80
    %v44 = vadd.s32 %v33, 88
    %v45 = vadd.s32 %v33, 96
    %v46 = vadd.s32 %v33, 104
    %v47 = vadd.s32 %v33, 112
    %v48 = vadd.s32 %v33, 120
    %v49 = vld [vmem:[%s1] sm:$0xff]
    %v50 = vld [vmem:[%s1 + $0x8] sm:$0xff]
    %v51 = vld [vmem:[%s1 + $0x10] sm:$0xff]
    %v52 = vld [vmem:[%s1 + $0x18] sm:$0xff]
    %v53 = vld [vmem:[%s1 + $0x20] sm:$0xff]
    %v54 = vld [vmem:[%s1 + $0x28] sm:$0xff]
    %v55 = vld [vmem:[%s1 + $0x30] sm:$0xff]
    %v56 = vld [vmem:[%s1 + $0x38] sm:$0xff]
    %v57 = vld [vmem:[%s1 + $0x40] sm:$0xff]
    %v58 = vld [vmem:[%s1 + $0x48] sm:$0xff]
    %v59 = vld [vmem:[%s1 + $0x50] sm:$0xff]
    %v60 = vld [vmem:[%s1 + $0x58] sm:$0xff]
    %v61 = vld [vmem:[%s1 + $0x60] sm:$0xff]
    %v62 = vld [vmem:[%s1 + $0x68] sm:$0xff]
    %v63 = vld [vmem:[%s1 + $0x70] sm:$0xff]
    %v64 = vld [vmem:[%s1 + $0x78] sm:$0xff]
    %66 = vset.pattern.permute.xlu0 0
    %67 = vperm.xlu0 %66, %v49
    %v68 = vpop.permute.xlu0 %67
    %71 = vset.pattern.permute.xlu0 0
    %72 = vperm.xlu0 %71, %v50
    %v73 = vpop.permute.xlu0 %72
    %76 = vset.pattern.permute.xlu0 0
    %77 = vperm.xlu0 %76, %v51
    %v78 = vpop.permute.xlu0 %77
    %81 = vset.pattern.permute.xlu0 0
    %82 = vperm.xlu0 %81, %v52
    %v83 = vpop.permute.xlu0 %82
    %86 = vset.pattern.permute.xlu0 0
    %87 = vperm.xlu0 %86, %v53
    %v88 = vpop.permute.xlu0 %87
    %91 = vset.pattern.permute.xlu0 0
    %92 = vperm.xlu0 %91, %v54
    %v93 = vpop.permute.xlu0 %92
    %96 = vset.pattern.permute.xlu0 0
    %97 = vperm.xlu0 %96, %v55
    %v98 = vpop.permute.xlu0 %97
    %101 = vset.pattern.permute.xlu0 0
    %102 = vperm.xlu0 %101, %v56
    %v103 = vpop.permute.xlu0 %102
    %106 = vset.pattern.permute.xlu0 0
    %107 = vperm.xlu0 %106, %v57
    %v108 = vpop.permute.xlu0 %107
    %111 = vset.pattern.permute.xlu0 0
    %112 = vperm.xlu0 %111, %v58
    %v113 = vpop.permute.xlu0 %112
    %116 = vset.pattern.permute.xlu0 0
    %117 = vperm.xlu0 %116, %v59
    %v118 = vpop.permute.xlu0 %117
    %121 = vset.pattern.permute.xlu0 0
    %122 = vperm.xlu0 %121, %v60
    %v123 = vpop.permute.xlu0 %122
    %126 = vset.pattern.permute.xlu0 0
    %127 = vperm.xlu0 %126, %v61
    %v128 = vpop.permute.xlu0 %127
    %131 = vset.pattern.permute.xlu0 0
    %132 = vperm.xlu0 %131, %v62
    %v133 = vpop.permute.xlu0 %132
    %136 = vset.pattern.permute.xlu0 0
    %137 = vperm.xlu0 %136, %v63
    %v138 = vpop.permute.xlu0 %137
    %141 = vset.pattern.permute.xlu0 0
    %142 = vperm.xlu0 %141, %v64
    %v143 = vpop.permute.xlu0 %142
    %v145 = vld [vmem:[%s0] sm:$0x1]
    %s146 = sld [smem:[#allocation3]]
    %v147 = vstv %s146
    %v148 = vadd.s32 %v145, %v147
    %v149 = vlaneseq
    %v150 = vshrl.u32 %v149, 7
    %v151 = vsub.s32 0, %v150
    %v152 = vrot.slane %v148, %v151
    %vm153 = vcmp.eq.s32.totalorder %v152, %v33
    %vm154 = vcmp.eq.s32.totalorder %v152, %v34
    %vm155 = vcmp.eq.s32.totalorder %v152, %v35
    %vm156 = vcmp.eq.s32.totalorder %v152, %v36
    %vm157 = vcmp.eq.s32.totalorder %v152, %v37
    %vm158 = vcmp.eq.s32.totalorder %v152, %v38
    %vm159 = vcmp.eq.s32.totalorder %v152, %v39
    %vm160 = vcmp.eq.s32.totalorder %v152, %v40
    %vm161 = vcmp.eq.s32.totalorder %v152, %v41
    %vm162 = vcmp.eq.s32.totalorder %v152, %v42
    %vm163 = vcmp.eq.s32.totalorder %v152, %v43
    %vm164 = vcmp.eq.s32.totalorder %v152, %v44
    %vm165 = vcmp.eq.s32.totalorder %v152, %v45
    %vm166 = vcmp.eq.s32.totalorder %v152, %v46
    %vm167 = vcmp.eq.s32.totalorder %v152, %v47
    %vm168 = vcmp.eq.s32.totalorder %v152, %v48
    %v169 = vsel %vm153, %v68, 0.0
    %v170 = vsel %vm154, %v73, 0.0
    %v171 = vsel %vm155, %v78, 0.0
    %v172 = vsel %vm156, %v83, 0.0
    %v173 = vsel %vm157, %v88, 0.0
    %v174 = vsel %vm158, %v93, 0.0
    %v175 = vsel %vm159, %v98, 0.0
    %v176 = vsel %vm160, %v103, 0.0
    %v177 = vsel %vm161, %v108, 0.0
    %v178 = vsel %vm162, %v113, 0.0
    %v179 = vsel %vm163, %v118, 0.0
    %v180 = vsel %vm164, %v123, 0.0
    %v181 = vsel %vm165, %v128, 0.0
    %v182 = vsel %vm166, %v133, 0.0
    %v183 = vsel %vm167, %v138, 0.0
    %v184 = vsel %vm168, %v143, 0.0
    %v185 = vadd.f32 %v169, %v170
    %v186 = vadd.f32 %v185, %v171
    %v187 = vadd.f32 %v186, %v172
    %v188 = vadd.f32 %v187, %v173
    %v189 = vadd.f32 %v188, %v174
    %v190 = vadd.f32 %v189, %v175
    %v191 = vadd.f32 %v190, %v176
    %v192 = vadd.f32 %v191, %v177
    %v193 = vadd.f32 %v192, %v178
    %v194 = vadd.f32 %v193, %v179
    %v195 = vadd.f32 %v194, %v180
    %v196 = vadd.f32 %v195, %v181
    %v197 = vadd.f32 %v196, %v182
    %v198 = vadd.f32 %v197, %v183
    %v199 = vadd.f32 %v198, %v184
    %v200 = vrot.slane %v199, 4
    %v201 = vadd.f32 %v199, %v200
    %v202 = vrot.slane %v201, 2
    %v203 = vadd.f32 %v201, %v202
    %v204 = vrot.slane %v203, 1
    %v205 = vadd.f32 %v203, %v204
    %v206 = vadd.f32 %v205, 0.0
    %v207 = vld [vmem:[%s0 + $0x1] sm:$0x1]
    %s208 = sld [smem:[#allocation3 + $0x1]]
    %v209 = vstv %s208
    %v210 = vadd.s32 %v207, %v209
    %v211 = vlaneseq
    %v212 = vshrl.u32 %v211, 7
    %v213 = vsub.s32 0, %v212
    %v214 = vrot.slane %v210, %v213
    %vm215 = vcmp.eq.s32.totalorder %v214, %v33
    %vm216 = vcmp.eq.s32.totalorder %v214, %v34
    %vm217 = vcmp.eq.s32.totalorder %v214, %v35
    %vm218 = vcmp.eq.s32.totalorder %v214, %v36
    %vm219 = vcmp.eq.s32.totalorder %v214, %v37
    %vm220 = vcmp.eq.s32.totalorder %v214, %v38
    %vm221 = vcmp.eq.s32.totalorder %v214, %v39
    %vm222 = vcmp.eq.s32.totalorder %v214, %v40
    %vm223 = vcmp.eq.s32.totalorder %v214, %v41
    %vm224 = vcmp.eq.s32.totalorder %v214, %v42
    %vm225 = vcmp.eq.s32.totalorder %v214, %v43
    %vm226 = vcmp.eq.s32.totalorder %v214, %v44
    %vm227 = vcmp.eq.s32.totalorder %v214, %v45
    %vm228 = vcmp.eq.s32.totalorder %v214, %v46
    %vm229 = vcmp.eq.s32.totalorder %v214, %v47
    %vm230 = vcmp.eq.s32.totalorder %v214, %v48
    %v231 = vsel %vm215, %v68, 0.0
    %v232 = vsel %vm216, %v73, 0.0
    %v233 = vsel %vm217, %v78, 0.0
    %v234 = vsel %vm218, %v83, 0.0
    %v235 = vsel %vm219, %v88, 0.0
    %v236 = vsel %vm220, %v93, 0.0
    %v237 = vsel %vm221, %v98, 0.0
    %v238 = vsel %vm222, %v103, 0.0
    %v239 = vsel %vm223, %v108, 0.0
    %v240 = vsel %vm224, %v113, 0.0
    %v241 = vsel %vm225, %v118, 0.0
    %v242 = vsel %vm226, %v123, 0.0
    %v243 = vsel %vm227, %v128, 0.0
    %v244 = vsel %vm228, %v133, 0.0
    %v245 = vsel %vm229, %v138, 0.0
    %v246 = vsel %vm230, %v143, 0.0
    %v247 = vadd.f32 %v231, %v232
    %v248 = vadd.f32 %v247, %v233
    %v249 = vadd.f32 %v248, %v234
    %v250 = vadd.f32 %v249, %v235
    %v251 = vadd.f32 %v250, %v236
    %v252 = vadd.f32 %v251, %v237
    %v253 = vadd.f32 %v252, %v238
    %v254 = vadd.f32 %v253, %v239
    %v255 = vadd.f32 %v254, %v240
    %v256 = vadd.f32 %v255, %v241
    %v257 = vadd.f32 %v256, %v242
    %v258 = vadd.f32 %v257, %v243
    %v259 = vadd.f32 %v258, %v244
    %v260 = vadd.f32 %v259, %v245
    %v261 = vadd.f32 %v260, %v246
    %v262 = vrot.slane %v261, 4
    %v263 = vadd.f32 %v261, %v262
    %v264 = vrot.slane %v263, 2
    %v265 = vadd.f32 %v263, %v264
    %v266 = vrot.slane %v265, 1
    %v267 = vadd.f32 %v265, %v266
    %v268 = vadd.f32 %v206, %v267
    %v269 = vld [vmem:[%s0 + $0x2] sm:$0x1]
    %s270 = sld [smem:[#allocation3 + $0x2]]
    %v271 = vstv %s270
    %v272 = vadd.s32 %v269, %v271
    %v273 = vlaneseq
    %v274 = vshrl.u32 %v273, 7
    %v275 = vsub.s32 0, %v274
    %v276 = vrot.slane %v272, %v275
    %vm277 = vcmp.eq.s32.totalorder %v276, %v33
    %vm278 = vcmp.eq.s32.totalorder %v276, %v34
    %vm279 = vcmp.eq.s32.totalorder %v276, %v35
    %vm280 = vcmp.eq.s32.totalorder %v276, %v36
    %vm281 = vcmp.eq.s32.totalorder %v276, %v37
    %vm282 = vcmp.eq.s32.totalorder %v276, %v38
    %vm283 = vcmp.eq.s32.totalorder %v276, %v39
    %vm284 = vcmp.eq.s32.totalorder %v276, %v40
    %vm285 = vcmp.eq.s32.totalorder %v276, %v41
    %vm286 = vcmp.eq.s32.totalorder %v276, %v42
    %vm287 = vcmp.eq.s32.totalorder %v276, %v43
    %vm288 = vcmp.eq.s32.totalorder %v276, %v44
    %vm289 = vcmp.eq.s32.totalorder %v276, %v45
    %vm290 = vcmp.eq.s32.totalorder %v276, %v46
    %vm291 = vcmp.eq.s32.totalorder %v276, %v47
    %vm292 = vcmp.eq.s32.totalorder %v276, %v48
    %v293 = vsel %vm277, %v68, 0.0
    %v294 = vsel %vm278, %v73, 0.0
    %v295 = vsel %vm279, %v78, 0.0
    %v296 = vsel %vm280, %v83, 0.0
    %v297 = vsel %vm281, %v88, 0.0
    %v298 = vsel %vm282, %v93, 0.0
    %v299 = vsel %vm283, %v98, 0.0
    %v300 = vsel %vm284, %v103, 0.0
    %v301 = vsel %vm285, %v108, 0.0
    %v302 = vsel %vm286, %v113, 0.0
    %v303 = vsel %vm287, %v118, 0.0
    %v304 = vsel %vm288, %v123, 0.0
    %v305 = vsel %vm289, %v128, 0.0
    %v306 = vsel %vm290, %v133, 0.0
    %v307 = vsel %vm291, %v138, 0.0
    %v308 = vsel %vm292, %v143, 0.0
    %v309 = vadd.f32 %v293, %v294
    %v310 = vadd.f32 %v309, %v295
    %v311 = vadd.f32 %v310, %v296
    %v312 = vadd.f32 %v311, %v297
    %v313 = vadd.f32 %v312, %v298
    %v314 = vadd.f32 %v313, %v299
    %v315 = vadd.f32 %v314, %v300
    %v316 = vadd.f32 %v315, %v301
    %v317 = vadd.f32 %v316, %v302
    %v318 = vadd.f32 %v317, %v303
    %v319 = vadd.f32 %v318, %v304
    %v320 = vadd.f32 %v319, %v305
    %v321 = vadd.f32 %v320, %v306
    %v322 = vadd.f32 %v321, %v307
    %v323 = vadd.f32 %v322, %v308
    %v324 = vrot.slane %v323, 4
    %v325 = vadd.f32 %v323, %v324
    %v326 = vrot.slane %v325, 2
    %v327 = vadd.f32 %v325, %v326
    %v328 = vrot.slane %v327, 1
    %v329 = vadd.f32 %v327, %v328
    %v330 = vadd.f32 %v268, %v329
    %s331 = sld [smem:[#allocation2]]
    %v332 = vstv %s331
    %v333 = vadd.f32 %v330, %v332
    %334 = vst [vmem:[#allocation6] sm:$0x1] %v333
    // Predicated region
    $region22: #{tpu_custom_call.1} parent=1 // pred_check
      _
    $region23: #{tpu_custom_call.1} parent=1 // pred_check_branch
      %336 = sbr.rel (0) target = $region25
    $region24: #{tpu_custom_call.1} parent=1 // pred_region
      %s338 = ssub.s32 16, 16
      %339 = vsyncadd [#allocation4], %s338
      %s341 = sshll.u32 [#allocation6], 4
      %s342 = int_to_ptr.vmem [resolvable:$true] %s341
      %344 = dma.vmem_to_hbm [thread:$0]  %s342, 16, %s4, [#allocation4]
    $region25: #{tpu_custom_call.1} parent=1 // pred_fallthru
      _
    // Predicated region
    $region26: #{tpu_custom_call.1} parent=1 // pred_check
      _
    $region27: #{tpu_custom_call.1} parent=1 // pred_check_branch
      %346 = sbr.rel (0) target = $region29
    $region28: #{tpu_custom_call.1} parent=1 // pred_region
      %347 = dma.done [#allocation4], 16
    $region29: #{tpu_custom_call.1} parent=1 // pred_fallthru
      _
    %348 = vsyncpa [#allocation4], 1
    %349 = vsyncpa [#allocation5], 1

</llo_original>
